<compile_context>
chip_gen: v7x
topology: tpu7x:2x2x1
jax: 0.10.0
libtpu: 0.0.40
codegen_flags: <defaults>
</compile_context>

<pallas_src>
import jax
import jax.numpy as jnp
from jax import lax
from jax.experimental import pallas as pl
from jax.experimental.pallas import tpu as pltpu


def _conv_gemm_kernel(w_ref, x_ref, b_ref, o_ref):
    # w_ref: [Cout, K]      (full weight, K = Cin*27)
    # x_ref: [1, K, TM]     (im2col patches, lane-dense along voxels)
    # b_ref: [Cout, 1]
    # o_ref: [1, Cout, TM]
    acc = jnp.dot(w_ref[...], x_ref[0], preferred_element_type=jnp.float32)
    o_ref[0] = (acc + b_ref[...]).astype(o_ref.dtype)


def _round_up(a, b):
    return ((a + b - 1) // b) * b


def downsample_conv3d(x, weight, bias):
    """Forward of DownSample: Conv3d(kernel_size=3, stride=2, padding=1).

    x:      [N, Cin, D, H, W]
    weight: [Cout, Cin, 3, 3, 3]   (PyTorch Conv3d layout)
    bias:   [Cout]
    returns [N, Cout, Do, Ho, Wo]
    """
    N, Cin, D, H, W = x.shape
    Cout = weight.shape[0]
    k, s, p = 3, 2, 1
    Do = (D + 2 * p - k) // s + 1
    Ho = (H + 2 * p - k) // s + 1
    Wo = (W + 2 * p - k) // s + 1
    K = Cin * k * k * k
    Mpn = Do * Ho * Wo                       # output voxels per batch sample

    # ---- im2col: P[n, ci*27 + kd*9 + kh*3 + kw, m] (overlapping strided
    #      windows; not expressible as a BlockSpec, so done in JAX) ----------
    xp = jnp.pad(x, ((0, 0), (0, 0), (p, p), (p, p), (p, p)))
    cols = []
    for kd in range(k):
        for kh in range(k):
            for kw in range(k):
                sl = lax.slice(
                    xp,
                    (0, 0, kd, kh, kw),
                    (N, Cin,
                     kd + s * (Do - 1) + 1,
                     kh + s * (Ho - 1) + 1,
                     kw + s * (Wo - 1) + 1),
                    (1, 1, s, s, s))          # [N, Cin, Do, Ho, Wo]
                cols.append(sl.reshape(N, Cin, Mpn))
    patches = jnp.stack(cols, axis=2).reshape(N, K, Mpn)   # [N, Cin*27, Mpn]

    # ---- lane-dense tiling of the voxel axis (pad, never whole-M blocks) ---
    TM = min(1024, _round_up(Mpn, 128))
    Mpad = _round_up(Mpn, TM)
    if Mpad != Mpn:
        patches = jnp.pad(patches, ((0, 0), (0, 0), (0, Mpad - Mpn)))

    w2d = weight.reshape(Cout, K)            # matches patch reduction ordering
    b2d = bias.reshape(Cout, 1)

    grid = (N, Mpad // TM)

    cost = pl.CostEstimate(
        flops=2 * N * Mpad * K * Cout,
        transcendentals=0,
        bytes_accessed=4 * (N * K * Mpad + Cout * K + Cout + N * Cout * Mpad),
    )

    out = pl.pallas_call(
        _conv_gemm_kernel,
        out_shape=jax.ShapeDtypeStruct((N, Cout, Mpad), x.dtype),
        grid_spec=pltpu.PrefetchScalarGridSpec(
            num_scalar_prefetch=0,
            grid=grid,
            in_specs=[
                pl.BlockSpec((Cout, K), lambda n, m: (0, 0)),     # weight (resident)
                pl.BlockSpec((1, K, TM), lambda n, m: (n, 0, m)),  # patches
                pl.BlockSpec((Cout, 1), lambda n, m: (0, 0)),      # bias
            ],
            out_specs=pl.BlockSpec((1, Cout, TM), lambda n, m: (n, 0, m)),
        ),
        compiler_params=pltpu.CompilerParams(
            dimension_semantics=("parallel", "parallel")),
        cost_estimate=cost,
    )(w2d, patches, b2d)

    # Drop the voxel padding; output is already channel-major per sample, so
    # this is a pure reshape (no transpose pass over the output).
    return out[:, :, :Mpn].reshape(N, Cout, Do, Ho, Wo)


def _reference(x, weight, bias):
    y = lax.conv_general_dilated(
        x, weight,
        window_strides=(2, 2, 2),
        padding=((1, 1), (1, 1), (1, 1)),
        dimension_numbers=('NCDHW', 'OIDHW', 'NCDHW'))
    return y + bias[None, :, None, None, None]


if __name__ == "__main__":
    inplanes, outplanes = 4, 16
    N, D, H, W = 2, 16, 16, 16

    key = jax.random.PRNGKey(0)
    kx, kw, kb = jax.random.split(key, 3)
    x = jax.random.normal(kx, (N, inplanes, D, H, W), dtype=jnp.float32)
    weight = 0.1 * jax.random.normal(
        kw, (outplanes, inplanes, 3, 3, 3), dtype=jnp.float32)
    bias = 0.1 * jax.random.normal(kb, (outplanes,), dtype=jnp.float32)

    out = downsample_conv3d(x, weight, bias)
    out = jax.block_until_ready(out)

    ref = _reference(x, weight, bias)
    assert out.shape == (N, outplanes, D // 2, H // 2, W // 2), out.shape
    assert jnp.allclose(out, ref, atol=1e-4, rtol=1e-4), float(
        jnp.max(jnp.abs(out - ref)))

    print("KERNEL_OK")
</pallas_src>

<mosaic_0001>
module attributes {stable_mosaic.version = 11 : i64} {
  func.func @_conv_gemm_kernel(%arg0: i32, %arg1: i32, %arg2: memref<16x108xf32, #tpu.memory_space<vmem>>, %arg3: memref<1x108x512xf32, #tpu.memory_space<vmem>>, %arg4: memref<16x1xf32, #tpu.memory_space<vmem>>, %arg5: memref<1x16x512xf32, #tpu.memory_space<vmem>>) attributes {dimension_semantics = [#tpu.dimension_semantics<parallel>, #tpu.dimension_semantics<parallel>], iteration_bounds = array<i64: 2, 1>, scalar_prefetch = 0 : i64, scratch_operands = 0 : i64, tpu.core_type = #tpu.core_type<tc>, window_params = [{pipeline_mode = #tpu.pipeline_mode<synchronous>, transform_indices = @transform_0, window_bounds = array<i64: 16, 108>}, {transform_indices = @transform_1, window_bounds = array<i64: 1, 108, 512>}, {pipeline_mode = #tpu.pipeline_mode<synchronous>, transform_indices = @transform_2, window_bounds = array<i64: 16, 1>}, {transform_indices = @transform_3, window_bounds = array<i64: 1, 16, 512>}]} {
    %c0 = arith.constant 0 : index
    %c0_0 = arith.constant 0 : index
    %0 = vector.load %arg2[%c0, %c0_0] : memref<16x108xf32, #tpu.memory_space<vmem>>, vector<16x108xf32>
    %c0_1 = arith.constant 0 : index
    %c0_2 = arith.constant 0 : index
    %c0_3 = arith.constant 0 : index
    %1 = vector.load %arg3[%c0_1, %c0_2, %c0_3] : memref<1x108x512xf32, #tpu.memory_space<vmem>>, vector<1x108x512xf32>
    %2 = vector.shape_cast %1 : vector<1x108x512xf32> to vector<108x512xf32>
    %cst = arith.constant dense<0.000000e+00> : vector<16x512xf32>
    %3 = tpu.matmul %0, %2, %cst {dimension_numbers = #tpu.dot_dimension_numbers<[1], [0], [0], [1], [0, 0, 1, 1], [], []>} : vector<16x108xf32>, vector<108x512xf32>, vector<16x512xf32> -> vector<16x512xf32>
    %c0_4 = arith.constant 0 : index
    %c0_5 = arith.constant 0 : index
    %4 = vector.load %arg4[%c0_4, %c0_5] : memref<16x1xf32, #tpu.memory_space<vmem>>, vector<16x1xf32>
    %5 = vector.broadcast %4 : vector<16x1xf32> to vector<16x512xf32>
    %6 = arith.addf %3, %5 : vector<16x512xf32>
    %c0_6 = arith.constant 0 : index
    %c0_7 = arith.constant 0 : index
    %c0_8 = arith.constant 0 : index
    %7 = vector.load %arg5[%c0_6, %c0_7, %c0_8] : memref<1x16x512xf32, #tpu.memory_space<vmem>>, vector<1x16x512xf32>
    %8 = vector.shape_cast %7 : vector<1x16x512xf32> to vector<16x512xf32>
    %9 = vector.shape_cast %6 : vector<16x512xf32> to vector<1x16x512xf32>
    tpu.vector_store %arg5[%c0_6, %c0_7, %c0_8], %9 {strides = array<i32>} : memref<1x16x512xf32, #tpu.memory_space<vmem>>, vector<1x16x512xf32>,
    return
  }
  func.func @transform_0(%arg0: i32, %arg1: i32) -> (i32, i32) {
    %c0_i32 = arith.constant 0 : i32
    %c0_i32_0 = arith.constant 0 : i32
    %c0_i32_1 = arith.constant 0 : i32
    return %c0_i32, %c0_i32_0 : i32, i32
  }
  func.func @transform_1(%arg0: i32, %arg1: i32) -> (i32, i32, i32) {
    %c0_i32 = arith.constant 0 : i32
    %c0_i32_0 = arith.constant 0 : i32
    return %arg0, %c0_i32, %arg1 : i32, i32, i32
  }
  func.func @transform_2(%arg0: i32, %arg1: i32) -> (i32, i32) {
    %c0_i32 = arith.constant 0 : i32
    %c0_i32_0 = arith.constant 0 : i32
    %c0_i32_1 = arith.constant 0 : i32
    return %c0_i32, %c0_i32_0 : i32, i32
  }
  func.func @transform_3(%arg0: i32, %arg1: i32) -> (i32, i32, i32) {
    %c0_i32 = arith.constant 0 : i32
    %c0_i32_0 = arith.constant 0 : i32
    return %arg0, %c0_i32, %arg1 : i32, i32, i32
  }
}

</mosaic_0001>

<llo_original>
// kernel: tpu_custom_call.1
$region0: #{tpu_custom_call.1}
  #allocation0 [shape = 'u32[]', space=smem, size = 0x4, offset = 0x4, fixed_abs, tag = 'smem constant byte address 0x4 - core index']
  #allocation1 [shape = 'u32[144,128]{1,0:T(1,128)}', space=vmem, size = 0x12000, scoped, tag = 'internal scratch']
  %s0 = inlined_call_operand.vmem [shape: f32[16,108], index: 0, kind: input, shape index: {}]
  %s1 = inlined_call_operand.vmem [shape: f32[2,108,512], index: 1, kind: input, shape index: {}]
  %s2 = inlined_call_operand.vmem [shape: f32[16,1], index: 2, kind: input, shape index: {}]
  %s3 = inlined_call_operand.hbm [shape: f32[2,16,512], index: 3, kind: output, shape index: {}]
  %s4 = sld [smem:[#allocation0]]
  $region45: #{tpu_custom_call.1} parent=0
    _
  %s6 = ssub.s32 1, %s4
  %s7 = scalar_select 0, %s6, %s4
  $region1: #{tpu_custom_call.1} parent=0
    #allocation2 [shape = 'u8[65536]{0}', space=vmem, size = 0x10000, scoped, tag = 'output window, operand 0']
    #allocation3 [shape = 's32[2]{0}', space=sflag, size = 0x8, scoped, tag = 'scoped memory for tpu_custom_call.1']
    %8 = vsyncpa [#allocation3], 0
    %s9 = scalar_lea.sflag [#allocation3], 1
    %10 = vsyncpa %s9, 0
    loop: start=0, step=1, limit=4
    $region2: #{tpu_custom_call.1} parent=1 // loop_pre_header
      _
    $region3: #{tpu_custom_call.1} parent=1 // loop_header
      %s12 = sphi 0, %s16
      %p13 = scmp.ge.s32.totalorder %s12, 4
      %s19 = sphi 0, %s31
      %s20 = sphi 0, %s27
      %s21 = sphi 0, %s19
      %s22 = sphi 0, %s20
      %s23 = sphi 0, %s21
      %s24 = sphi 0, %s22
      %s32 = sphi 0, %s32
      %s34 = sphi 0, %s32
      %s35 = sphi 0, %s34
      %s49 = sphi 0, %s35
      %s57 = sphi 0, %s59
      %s60 = sphi 0, %s57
      %s61 = sphi 0, %s60
      %s77 = sphi 0, %s61
      %s81 = sphi 0, %s81
      %s83 = sphi 0, %s81
      %s84 = sphi 0, %s83
      %s98 = sphi 0, %s84
      %s106 = sphi 0, %s108
      %s109 = sphi 0, %s106
      %s110 = sphi 0, %s109
      %s126 = sphi 0, %s110
    $region4: #{tpu_custom_call.1} parent=1 // loop_header_branch
      %15 = sbr.rel (%p13) target = $region8
    $region5: #{tpu_custom_call.1} parent=1 // loop_body
      %s17 = ssub.s32 %s12, 1
      %s18 = ssub.s32 %s12, 2
      %s25 = sadd.s32 1, %s20
      %p26 = scmp.ge.s32.totalorder %s25, 1
      %s27 = scalar_select %p26, 0, %s25
      %s28 = sadd.s32 1, %s19
      %s29 = scalar_select %p26, %s28, %s19
      %p30 = scmp.ge.s32.totalorder %s29, 2
      %s31 = scalar_select %p30, 0, %s29
      %s33 = sadd.s32 %s32, 1
      %p36 = scmp.eq.s32.totalorder %s12, 1
      %p37 = scmp.ne.s32.totalorder %s32, %s34
      %p38 = scmp.eq.s32.totalorder %s12, 0
      %p39 = por %p37, %p38
      %p40 = scmp.ne.s32.totalorder %s32, %s34
      %p41 = scmp.eq.s32.totalorder %s17, 1
      %p42 = por %p40, %p41
      %p43 = scmp.ne.s32.totalorder %s34, %s35
      %p44 = scmp.eq.s32.totalorder %s17, 0
      %p45 = por %p43, %p44
      %p46 = scmp.ne.s32.totalorder %s34, %s35
      %p47 = scmp.eq.s32.totalorder %s18, 1
      %p48 = por %p46, %p47
      %p50 = scmp.ne.s32.totalorder %s35, %s49
      %p51 = scmp.eq.s32.totalorder %s18, 0
      %p52 = por %p50, %p51
      %s53 = ssub.s32 %s19, %s31
      %s54 = ssub.s32 %s20, %s27
      %s55 = sor.u32 %s53, %s54
      %p56 = scmp.eq.s32.totalorder %s55, 0
      %s58 = sadd.s32 %s57, 1
      %s59 = scalar_select %p56, %s57, %s58
      %p62 = pneg %p56
      %p63 = scmp.eq.s32.totalorder %s12, 1
      %p64 = por %p62, %p63
      %p65 = scmp.ne.s32.totalorder %s57, %s60
      %p66 = scmp.eq.s32.totalorder %s12, 0
      %p67 = por %p65, %p66
      %p68 = scmp.ne.s32.totalorder %s57, %s60
      %p69 = scmp.eq.s32.totalorder %s17, 1
      %p70 = por %p68, %p69
      %p71 = scmp.ne.s32.totalorder %s60, %s61
      %p72 = scmp.eq.s32.totalorder %s17, 0
      %p73 = por %p71, %p72
      %p74 = scmp.ne.s32.totalorder %s60, %s61
      %p75 = scmp.eq.s32.totalorder %s18, 1
      %p76 = por %p74, %p75
      %p78 = scmp.ne.s32.totalorder %s61, %s77
      %p79 = scmp.eq.s32.totalorder %s18, 0
      %p80 = por %p78, %p79
      %s82 = sadd.s32 %s81, 1
      %p85 = scmp.eq.s32.totalorder %s12, 1
      %p86 = scmp.ne.s32.totalorder %s81, %s83
      %p87 = scmp.eq.s32.totalorder %s12, 0
      %p88 = por %p86, %p87
      %p89 = scmp.ne.s32.totalorder %s81, %s83
      %p90 = scmp.eq.s32.totalorder %s17, 1
      %p91 = por %p89, %p90
      %p92 = scmp.ne.s32.totalorder %s83, %s84
      %p93 = scmp.eq.s32.totalorder %s17, 0
      %p94 = por %p92, %p93
      %p95 = scmp.ne.s32.totalorder %s83, %s84
      %p96 = scmp.eq.s32.totalorder %s18, 1
      %p97 = por %p95, %p96
      %p99 = scmp.ne.s32.totalorder %s84, %s98
      %p100 = scmp.eq.s32.totalorder %s18, 0
      %p101 = por %p99, %p100
      %s102 = ssub.s32 %s19, %s31
      %s103 = ssub.s32 %s20, %s27
      %s104 = sor.u32 %s102, %s103
      %p105 = scmp.eq.s32.totalorder %s104, 0
      %s107 = sadd.s32 %s106, 1
      %s108 = scalar_select %p105, %s106, %s107
      %p111 = pneg %p105
      %p112 = scmp.eq.s32.totalorder %s12, 1
      %p113 = por %p111, %p112
      %p114 = scmp.ne.s32.totalorder %s106, %s109
      %p115 = scmp.eq.s32.totalorder %s12, 0
      %p116 = por %p114, %p115
      %p117 = scmp.ne.s32.totalorder %s106, %s109
      %p118 = scmp.eq.s32.totalorder %s17, 1
      %p119 = por %p117, %p118
      %p120 = scmp.ne.s32.totalorder %s109, %s110
      %p121 = scmp.eq.s32.totalorder %s17, 0
      %p122 = por %p120, %p121
      %p123 = scmp.ne.s32.totalorder %s109, %s110
      %p124 = scmp.eq.s32.totalorder %s18, 1
      %p125 = por %p123, %p124
      %p127 = scmp.ne.s32.totalorder %s110, %s126
      %p128 = scmp.eq.s32.totalorder %s18, 0
      %p129 = por %p127, %p128
      %p130 = scmp.le.s32.totalorder 1, %s12
      %p131 = scmp.lt.s32.totalorder %s12, 3
      %p132 = pnand %p130, %p131
      %p133 = pneg %p132
      // Predicated region
      $region9: #{tpu_custom_call.1} parent=5 // pred_check
        _
      $region10: #{tpu_custom_call.1} parent=5 // pred_check_branch
        %135 = sbr.rel (%p132) target = $region12
      $region11: #{tpu_custom_call.1} parent=5 // pred_region
        %s136 = ssub.s32 %s12, 1
        // Predicated region
        $region13: #{tpu_custom_call.1} parent=11 // pred_check
          %p137 = pneg %p45
        $region14: #{tpu_custom_call.1} parent=11 // pred_check_branch
          %139 = sbr.rel (%p137) target = $region16
        $region15: #{tpu_custom_call.1} parent=11 // pred_region
          _
        $region16: #{tpu_custom_call.1} parent=11 // pred_fallthru
          _
        // Predicated region
        $region17: #{tpu_custom_call.1} parent=11 // pred_check
          %p140 = pneg %p94
        $region18: #{tpu_custom_call.1} parent=11 // pred_check_branch
          %142 = sbr.rel (%p140) target = $region20
        $region19: #{tpu_custom_call.1} parent=11 // pred_region
          _
        $region20: #{tpu_custom_call.1} parent=11 // pred_fallthru
          _
      $region12: #{tpu_custom_call.1} parent=5 // pred_fallthru
        _
      %p143 = scmp.lt.s32.totalorder %s12, 2
      // Predicated region
      $region21: #{tpu_custom_call.1} parent=5 // pred_check
        %p144 = pneg %p143
      $region22: #{tpu_custom_call.1} parent=5 // pred_check_branch
        %146 = sbr.rel (%p144) target = $region24
      $region23: #{tpu_custom_call.1} parent=5 // pred_region
        // Predicated region
        $region25: #{tpu_custom_call.1} parent=23 // pred_check
          %p147 = pneg %p67
        $region26: #{tpu_custom_call.1} parent=23 // pred_check_branch
          %149 = sbr.rel (%p147) target = $region28
        $region27: #{tpu_custom_call.1} parent=23 // pred_region
          %s150 = smul.u32 4, %s20
          %p151 = scmp.lt.s32.totalorder %s19, 1
          %s152 = scalar_select %p151, %s19, 1
          %p153 = scmp.lt.s32.totalorder %s150, 3
          %s154 = scalar_select %p153, %s150, 3
          %s155 = smul.addr %s152, 56
          %s156 = sadd.s32 %s154, %s155
          %s157 = smul.addr %s156, 8
          %s158 = scalar_lea.vmem %s1, %s157
          %s159 = smul.u32 4, %s20
        $region28: #{tpu_custom_call.1} parent=23 // pred_fallthru
          _
      $region24: #{tpu_custom_call.1} parent=5 // pred_fallthru
        _
      %p160 = scmp.le.s32.totalorder 1, %s12
      %p161 = scmp.lt.s32.totalorder %s12, 3
      %p162 = pnand %p160, %p161
      %p163 = pneg %p162
      // Predicated region
      $region29: #{tpu_custom_call.1} parent=5 // pred_check
        _
      $region30: #{tpu_custom_call.1} parent=5 // pred_check_branch
        %165 = sbr.rel (%p162) target = $region32
      $region31: #{tpu_custom_call.1} parent=5 // pred_region
        %s166 = ssub.s32 %s12, 1
        %p167 = pneg %p45
        %p168 = pneg %p42
        %s169 = smul.u32 4, %s22
        %p170 = scmp.lt.s32.totalorder %s21, 1
        %s171 = scalar_select %p170, %s21, 1
        %p172 = scmp.lt.s32.totalorder %s169, 3
        %s173 = scalar_select %p172, %s169, 3
        %s174 = smul.addr %s171, 56
        %s175 = sadd.s32 %s173, %s174
        %s176 = smul.addr %s175, 8
        %s177 = scalar_lea.vmem %s1, %s176
        %p178 = pneg %p73
        %p179 = pneg %p70
        %p180 = pneg %p94
        %p181 = pneg %p91
        %p182 = pneg %p122
        %p183 = pneg %p119
        %s184 = sand.u32 %s109, 1
        %s185 = scalar_lea.sflag [#allocation3], %s184
        %s186 = sand.u32 %s109, 1
        %s187 = smul.addr %s186, 64
        %s188 = scalar_lea.vmem [#allocation2], %s187
        %s189 = smul.u32 4, %s22
        %p190 = scmp.lt.s32.totalorder %s21, 1
        %s191 = scalar_select %p190, %s21, 1
        %p192 = scmp.lt.s32.totalorder %s189, 3
        %s193 = scalar_select %p192, %s189, 3
        %s194 = smul.addr %s191, 56
        %s195 = sadd.s32 %s193, %s194
        %s196 = smul.addr %s195, 8
        %s197 = scalar_lea.vmem %s1, %s196
        %s198 = smul.u32 4, %s22
        %s199 = smul.u32 4, %s22
        %v200 = vld [vmem:[%s0] sm:$0xff]
        %v201 = vld [vmem:[%s0 + $0x8] sm:$0xff]
        %v202 = vld [vmem:[%s197] sm:$0xff]
        %v203 = vld [vmem:[%s197 + $0x8] sm:$0xff]
        %v204 = vld [vmem:[%s197 + $0x10] sm:$0xff]
        %v205 = vld [vmem:[%s197 + $0x18] sm:$0xff]
        %v206 = vld [vmem:[%s197 + $0x20] sm:$0xff]
        %v207 = vld [vmem:[%s197 + $0x28] sm:$0xff]
        %v208 = vld [vmem:[%s197 + $0x30] sm:$0xff]
        %v209 = vld [vmem:[%s197 + $0x38] sm:$0xff]
        %v210 = vld [vmem:[%s197 + $0x40] sm:$0xff]
        %v211 = vld [vmem:[%s197 + $0x48] sm:$0xff]
        %v212 = vld [vmem:[%s197 + $0x50] sm:$0xff]
        %v213 = vld [vmem:[%s197 + $0x58] sm:$0xff]
        %v214 = vld [vmem:[%s197 + $0x60] sm:$0xff]
        %v215 = vld [vmem:[%s197 + $0x68] sm:$0xff]
        %v216 = vld [vmem:[%s197 + $0x70] sm:$0xff]
        %v217 = vld [vmem:[%s197 + $0x78] sm:$0xff]
        %v218 = vld [vmem:[%s197 + $0x80] sm:$0xff]
        %v219 = vld [vmem:[%s197 + $0x88] sm:$0xff]
        %v220 = vld [vmem:[%s197 + $0x90] sm:$0xff]
        %v221 = vld [vmem:[%s197 + $0x98] sm:$0xff]
        %v222 = vld [vmem:[%s197 + $0xa0] sm:$0xff]
        %v223 = vld [vmem:[%s197 + $0xa8] sm:$0xff]
        %v224 = vld [vmem:[%s197 + $0xb0] sm:$0xff]
        %v225 = vld [vmem:[%s197 + $0xb8] sm:$0xff]
        %v226 = vld [vmem:[%s197 + $0xc0] sm:$0xff]
        %v227 = vld [vmem:[%s197 + $0xc8] sm:$0xff]
        %v228 = vld [vmem:[%s197 + $0xd0] sm:$0xff]
        %v229 = vld [vmem:[%s197 + $0xd8] sm:$0xff]
        %v230 = vld [vmem:[%s197 + $0xe0] sm:$0xff]
        %v231 = vld [vmem:[%s197 + $0xe8] sm:$0xff]
        %v232 = vld [vmem:[%s197 + $0xf0] sm:$0xff]
        %v233 = vld [vmem:[%s197 + $0xf8] sm:$0xff]
        %v234 = vld [vmem:[%s197 + $0x100] sm:$0xff]
        %v235 = vld [vmem:[%s197 + $0x108] sm:$0xff]
        %v236 = vld [vmem:[%s197 + $0x110] sm:$0xff]
        %v237 = vld [vmem:[%s197 + $0x118] sm:$0xff]
        %v238 = vld [vmem:[%s197 + $0x120] sm:$0xff]
        %v239 = vld [vmem:[%s197 + $0x128] sm:$0xff]
        %v240 = vld [vmem:[%s197 + $0x130] sm:$0xff]
        %v241 = vld [vmem:[%s197 + $0x138] sm:$0xff]
        %v242 = vld [vmem:[%s197 + $0x140] sm:$0xff]
        %v243 = vld [vmem:[%s197 + $0x148] sm:$0xff]
        %v244 = vld [vmem:[%s197 + $0x150] sm:$0xff]
        %v245 = vld [vmem:[%s197 + $0x158] sm:$0xff]
        %v246 = vld [vmem:[%s197 + $0x160] sm:$0xff]
        %v247 = vld [vmem:[%s197 + $0x168] sm:$0xff]
        %v248 = vld [vmem:[%s197 + $0x170] sm:$0xff]
        %v249 = vld [vmem:[%s197 + $0x178] sm:$0xff]
        %v250 = vld [vmem:[%s197 + $0x180] sm:$0xff]
        %v251 = vld [vmem:[%s197 + $0x188] sm:$0xff]
        %v252 = vld [vmem:[%s197 + $0x190] sm:$0xff]
        %v253 = vld [vmem:[%s197 + $0x198] sm:$0xff]
        %v254 = vld [vmem:[%s197 + $0x1a0] sm:$0xf]
        %v255 = vld [vmem:[%s197 + $0x1a8] sm:$0xf]
        %v256 = vld [vmem:[%s197 + $0x1b0] sm:$0xf]
        %v257 = vld [vmem:[%s197 + $0x1b8] sm:$0xf]
        %v258 = vld [vmem:[%s2] sm:$0xff]
        %v259 = vld [vmem:[%s2 + $0x8] sm:$0xff]
        %261 = vset.pattern.permute.xlu0 0
        %262 = vperm.xlu0 %261, %v258
        %v263 = vpop.permute.xlu0 %262
        %266 = vset.pattern.permute.xlu0 0
        %267 = vperm.xlu0 %266, %v259
        %v268 = vpop.permute.xlu0 %267
        %vm270 = vcmask 883712
        %v272 = vsel %vm270, %v200, 0
        %v275 = vsel %vm270, %v201, 0
        %vm277 = vcmask 1043456
        %v279 = vsel %vm277, %v254, 0
        %v282 = vsel %vm277, %v255, 0
        %v285 = vsel %vm277, %v256, 0
        %v288 = vsel %vm277, %v257, 0
        %290 = vmatprep.subr.mxu0 %v203
        %291 = vmatpush1.msra.mxu0 %v202
        %292 = vmatprep.subr.mxu0 %v207
        %293 = vmatpush1.msra.mxu0 %v206
        %294 = vmatprep.subr.mxu0 %v211
        %295 = vmatpush1.msra.mxu0 %v210
        %296 = vmatprep.subr.mxu0 %v215
        %297 = vmatpush1.msra.mxu0 %v214
        %298 = vmatprep.subr.mxu0 %v219
        %299 = vmatpush1.msra.mxu0 %v218
        %300 = vmatprep.subr.mxu0 %v223
        %301 = vmatpush1.msra.mxu0 %v222
        %302 = vmatprep.subr.mxu0 %v227
        %303 = vmatpush1.msra.mxu0 %v226
        %304 = vmatprep.subr.mxu0 %v231
        %305 = vmatpush1.msra.mxu0 %v230
        %306 = vmatprep.subr.mxu0 %v235
        %307 = vmatpush1.msra.mxu0 %v234
        %308 = vmatprep.subr.mxu0 %v239
        %309 = vmatpush1.msra.mxu0 %v238
        %310 = vmatprep.subr.mxu0 %v243
        %311 = vmatpush1.msra.mxu0 %v242
        %312 = vmatprep.subr.mxu0 %v247
        %313 = vmatpush1.msra.mxu0 %v246
        %314 = vmatprep.subr.mxu0 %v251
        %315 = vmatpush1.msra.mxu0 %v250
        %316 = vmatprep.subr.mxu0 %v282
        %317 = vmatpush1.msra.mxu0 %v279
        %318 = vmatprep.subr.mxu0 0.0
        %319 = vmatpush1.msra.mxu0 0.0
        %320 = vmatprep.subr.mxu0 0.0
        %321 = vmatpush1.msra.mxu0 0.0
        %322 = vmatprep.subr.mxu0 0.0
        %323 = vmatpush1.msra.mxu0 0.0
        %324 = vmatprep.subr.mxu0 0.0
        %325 = vmatpush1.msra.mxu0 0.0
        %326 = vmatprep.subr.mxu0 0.0
        %327 = vmatpush1.msra.mxu0 0.0
        %328 = vmatprep.subr.mxu0 0.0
        %329 = vmatpush1.msra.mxu0 0.0
        %330 = vmatprep.subr.mxu0 0.0
        %331 = vmatpush1.msra.mxu0 0.0
        %332 = vmatprep.subr.mxu0 0.0
        %333 = vmatpush1.msra.mxu0 0.0
        %334 = vmatprep.subr.mxu0 0.0
        %335 = vmatpush1.msra.mxu0 0.0
        %336 = vmatprep.subr.mxu0 0.0
        %337 = vmatpush1.msra.mxu0 0.0
        %338 = vmatprep.subr.mxu0 0.0
        %339 = vmatpush1.msra.mxu0 0.0
        %340 = vmatprep.subr.mxu0 0.0
        %341 = vmatpush1.msra.mxu0 0.0
        %342 = vmatprep.subr.mxu0 0.0
        %343 = vmatpush1.msra.mxu0 0.0
        %344 = vmatprep.subr.mxu0 0.0
        %345 = vmatpush1.msra.mxu0 0.0
        %346 = vmatprep.subr.mxu0 0.0
        %347 = vmatpush1.msra.mxu0 0.0
        %348 = vmatprep.subr.mxu0 0.0
        %349 = vmatpush1.msra.mxu0 0.0
        %350 = vmatprep.subr.mxu0 0.0
        %351 = vmatpush1.msra.mxu0 0.0
        %352 = vmatprep.subr.mxu0 0.0
        %353 = vmatpush1.msra.mxu0 0.0
        %354 = vmatprep.mubr.f32.mxu0 0.0
        %355 = vmatmul.mubr.f32.gmra.mrb[0].mxu0 %v272
        %v356 = vpop.f32.mrb[0].mxu0
        %v357 = vadd.f32 %v263, %v356
        %v358 = vpop.f32.mrb[0].mxu0
        %v359 = vadd.f32 %v263, %v358
        %360 = vmatprep.mubr.f32.mxu0 0.0
        %361 = vmatmul.mubr.f32.gmra.mrb[0].mxu0 %v275
        %v362 = vpop.f32.mrb[0].mxu0
        %v363 = vadd.f32 %v268, %v362
        %v364 = vpop.f32.mrb[0].mxu0
        %v365 = vadd.f32 %v268, %v364
        %366 = vdwg.mxu0
        %367 = vmatprep.subr.mxu0 %v205
        %368 = vmatpush1.msra.mxu0 %v204
        %369 = vmatprep.subr.mxu0 %v209
        %370 = vmatpush1.msra.mxu0 %v208
        %371 = vmatprep.subr.mxu0 %v213
        %372 = vmatpush1.msra.mxu0 %v212
        %373 = vmatprep.subr.mxu0 %v217
        %374 = vmatpush1.msra.mxu0 %v216
        %375 = vmatprep.subr.mxu0 %v221
        %376 = vmatpush1.msra.mxu0 %v220
        %377 = vmatprep.subr.mxu0 %v225
        %378 = vmatpush1.msra.mxu0 %v224
        %379 = vmatprep.subr.mxu0 %v229
        %380 = vmatpush1.msra.mxu0 %v228
        %381 = vmatprep.subr.mxu0 %v233
        %382 = vmatpush1.msra.mxu0 %v232
        %383 = vmatprep.subr.mxu0 %v237
        %384 = vmatpush1.msra.mxu0 %v236
        %385 = vmatprep.subr.mxu0 %v241
        %386 = vmatpush1.msra.mxu0 %v240
        %387 = vmatprep.subr.mxu0 %v245
        %388 = vmatpush1.msra.mxu0 %v244
        %389 = vmatprep.subr.mxu0 %v249
        %390 = vmatpush1.msra.mxu0 %v248
        %391 = vmatprep.subr.mxu0 %v253
        %392 = vmatpush1.msra.mxu0 %v252
        %393 = vmatprep.subr.mxu0 %v288
        %394 = vmatpush1.msra.mxu0 %v285
        %395 = vmatprep.subr.mxu0 0.0
        %396 = vmatpush1.msra.mxu0 0.0
        %397 = vmatprep.subr.mxu0 0.0
        %398 = vmatpush1.msra.mxu0 0.0
        %399 = vmatprep.subr.mxu0 0.0
        %400 = vmatpush1.msra.mxu0 0.0
        %401 = vmatprep.subr.mxu0 0.0
        %402 = vmatpush1.msra.mxu0 0.0
        %403 = vmatprep.subr.mxu0 0.0
        %404 = vmatpush1.msra.mxu0 0.0
        %405 = vmatprep.subr.mxu0 0.0
        %406 = vmatpush1.msra.mxu0 0.0
        %407 = vmatprep.subr.mxu0 0.0
        %408 = vmatpush1.msra.mxu0 0.0
        %409 = vmatprep.subr.mxu0 0.0
        %410 = vmatpush1.msra.mxu0 0.0
        %411 = vmatprep.subr.mxu0 0.0
        %412 = vmatpush1.msra.mxu0 0.0
        %413 = vmatprep.subr.mxu0 0.0
        %414 = vmatpush1.msra.mxu0 0.0
        %415 = vmatprep.subr.mxu0 0.0
        %416 = vmatpush1.msra.mxu0 0.0
        %417 = vmatprep.subr.mxu0 0.0
        %418 = vmatpush1.msra.mxu0 0.0
        %419 = vmatprep.subr.mxu0 0.0
        %420 = vmatpush1.msra.mxu0 0.0
        %421 = vmatprep.subr.mxu0 0.0
        %422 = vmatpush1.msra.mxu0 0.0
        %423 = vmatprep.subr.mxu0 0.0
        %424 = vmatpush1.msra.mxu0 0.0
        %425 = vmatprep.subr.mxu0 0.0
        %426 = vmatpush1.msra.mxu0 0.0
        %427 = vmatprep.subr.mxu0 0.0
        %428 = vmatpush1.msra.mxu0 0.0
        %429 = vmatprep.subr.mxu0 0.0
        %430 = vmatpush1.msra.mxu0 0.0
        %431 = vmatprep.mubr.f32.mxu0 0.0
        %432 = vmatmul.mubr.f32.gmra.mrb[0].mxu0 %v272
        %v433 = vpop.f32.mrb[0].mxu0
        %v434 = vadd.f32 %v263, %v433
        %v435 = vpop.f32.mrb[0].mxu0
        %v436 = vadd.f32 %v263, %v435
        %437 = vmatprep.mubr.f32.mxu0 0.0
        %438 = vmatmul.mubr.f32.gmra.mrb[0].mxu0 %v275
        %v439 = vpop.f32.mrb[0].mxu0
        %v440 = vadd.f32 %v268, %v439
        %v441 = vpop.f32.mrb[0].mxu0
        %v442 = vadd.f32 %v268, %v441
        %443 = vdwg.mxu0
        %444 = vst [vmem:[%s188] sm:$0xff] %v357
        %445 = vst [vmem:[%s188 + $0x8] sm:$0xff] %v359
        %446 = vst [vmem:[%s188 + $0x10] sm:$0xff] %v434
        %447 = vst [vmem:[%s188 + $0x18] sm:$0xff] %v436
        %448 = vst [vmem:[%s188 + $0x20] sm:$0xff] %v363
        %449 = vst [vmem:[%s188 + $0x28] sm:$0xff] %v365
        %450 = vst [vmem:[%s188 + $0x30] sm:$0xff] %v440
        %451 = vst [vmem:[%s188 + $0x38] sm:$0xff] %v442
        %s452 = sand.u32 %s109, 1
        %s453 = scalar_lea.sflag [#allocation3], %s452
        %s454 = sand.u32 %s109, 1
        %s455 = smul.addr %s454, 64
        %s456 = scalar_lea.vmem [#allocation2], %s455
        // Predicated region
        $region33: #{tpu_custom_call.1} parent=31 // pred_check
          %p457 = pneg %p119
        $region34: #{tpu_custom_call.1} parent=31 // pred_check_branch
          %459 = sbr.rel (%p457) target = $region36
        $region35: #{tpu_custom_call.1} parent=31 // pred_region
          %s460 = smul.u32 4, %s22
          %s462 = ssub.s32 1024, 1024
          %463 = vsyncadd %s453, %s462
          %s464 = smul.addr %s21, 8
          %s465 = sadd.s32 %s460, %s464
          %s466 = smul.addr %s465, 128
          %s467 = scalar_lea.hbm %s3, %s466
          %s468 = sshll.u32 %s456, 4
          %s469 = int_to_ptr.vmem [resolvable:$true] %s468
          %474 = dma.vmem_to_hbm [thread:$0]  %s469, 1024, %s467, %s453, 512, 512, 32
        $region36: #{tpu_custom_call.1} parent=31 // pred_fallthru
          _
      $region32: #{tpu_custom_call.1} parent=5 // pred_fallthru
        _
      %p475 = scmp.le.s32.totalorder 2, %s12
      // Predicated region
      $region37: #{tpu_custom_call.1} parent=5 // pred_check
        %p476 = pneg %p475
      $region38: #{tpu_custom_call.1} parent=5 // pred_check_branch
        %478 = sbr.rel (%p476) target = $region40
      $region39: #{tpu_custom_call.1} parent=5 // pred_region
        %s479 = ssub.s32 %s12, 2
        // Predicated region
        $region41: #{tpu_custom_call.1} parent=39 // pred_check
          %p480 = pneg %p125
        $region42: #{tpu_custom_call.1} parent=39 // pred_check_branch
          %482 = sbr.rel (%p480) target = $region44
        $region43: #{tpu_custom_call.1} parent=39 // pred_region
          %s483 = sand.u32 %s110, 1
          %s484 = scalar_lea.sflag [#allocation3], %s483
          %s485 = sand.u32 %s110, 1
          %s486 = smul.addr %s485, 64
          %s487 = scalar_lea.vmem [#allocation2], %s486
          %488 = dma.done %s484, 1024
        $region44: #{tpu_custom_call.1} parent=39 // pred_fallthru
          _
      $region40: #{tpu_custom_call.1} parent=5 // pred_fallthru
        _
    $region6: #{tpu_custom_call.1} parent=1 // loop_footer
      %s16 = sadd.s32 1, %s12
    $region7: #{tpu_custom_call.1} parent=1 // loop_footer_branch
      %11 = sbr.rel target = $region3
    $region8: #{tpu_custom_call.1} parent=1 // loop_exit
      _
    %489 = vsyncpa [#allocation3], 1
    %s490 = scalar_lea.sflag [#allocation3], 1
    %491 = vsyncpa %s490, 1

</llo_original>
